<compile_context>
chip_gen: v6e
topology: v6e:2x2x1
jax: 0.10.0
libtpu: 0.0.40
codegen_flags: <defaults>
</compile_context>

<pallas_src>
import functools

import jax
import jax.numpy as jnp
from jax.experimental import pallas as pl
from jax.experimental.pallas import tpu as pltpu

_LANE = 128
_SUBLANE = 8
_TARGET_BLOCK_BYTES = 8 * 1024 * 1024  # logits bytes per pipeline block


def _focal_sum_classes_on_lanes(n_total, alpha, gamma,
                                logits_ref, targets_ref, out_ref, acc_ref):
    """Layout: logits block (TN, C) with classes on lanes, targets (TN, 1)."""
    i = pl.program_id(0)

    @pl.when(i == 0)
    def _init():
        acc_ref[...] = jnp.zeros_like(acc_ref)

    x = logits_ref[...].astype(jnp.float32)                     # (TN, C)
    t = targets_ref[...]                                        # (TN, 1) int32
    tn = x.shape[0]

    # numerically-stable softmax pieces (reduce over the lane/class axis)
    m = jnp.max(x, axis=-1, keepdims=True)                      # (TN, 1)
    e = jnp.exp(x - m)                                          # (TN, C)
    s = jnp.sum(e, axis=-1, keepdims=True)                      # (TN, 1)

    # gather target column via one-hot mask (no dynamic vreg gather on TPU)
    col = jax.lax.broadcasted_iota(jnp.int32, x.shape, 1)       # (TN, C)
    onehot = (col == t).astype(jnp.float32)
    tgt_logit = jnp.sum(onehot * x, axis=-1, keepdims=True)     # (TN, 1)
    e_tgt = jnp.sum(onehot * e, axis=-1, keepdims=True)         # exp(tgt - m)

    ce = (m - tgt_logit) + jnp.log(s)                           # lse - tgt_logit
    pt = e_tgt * pl.reciprocal(s, approx=False)                 # == exp(-ce)
    focal = alpha * (1.0 - pt) ** gamma * ce                    # (TN, 1)

    # mask padded tail rows of the last block
    row = jax.lax.broadcasted_iota(jnp.int32, (tn, 1), 0) + i * tn
    focal = jnp.where(row < n_total, focal, 0.0)

    acc_ref[...] += jnp.sum(focal, axis=0, keepdims=True)

    @pl.when(i == pl.num_programs(0) - 1)
    def _finalize():
        out_ref[...] = acc_ref[...] * (1.0 / n_total)


def _focal_sum_samples_on_lanes(n_total, alpha, gamma,
                                logits_ref, targets_ref, out_ref, acc_ref):
    """Layout: logits block (C, TN) with samples on lanes, targets (1, TN)."""
    i = pl.program_id(0)

    @pl.when(i == 0)
    def _init():
        acc_ref[...] = jnp.zeros_like(acc_ref)

    x = logits_ref[...].astype(jnp.float32)                     # (C, TN)
    t = targets_ref[...]                                        # (1, TN) int32
    tn = x.shape[1]

    m = jnp.max(x, axis=0, keepdims=True)                       # (1, TN)
    e = jnp.exp(x - m)                                          # (C, TN)
    s = jnp.sum(e, axis=0, keepdims=True)                       # (1, TN)

    cls = jax.lax.broadcasted_iota(jnp.int32, x.shape, 0)       # class ids
    onehot = (cls == t).astype(jnp.float32)                     # (C, TN)
    tgt_logit = jnp.sum(onehot * x, axis=0, keepdims=True)      # (1, TN)
    e_tgt = jnp.sum(onehot * e, axis=0, keepdims=True)

    ce = (m - tgt_logit) + jnp.log(s)
    pt = e_tgt * pl.reciprocal(s, approx=False)
    focal = alpha * (1.0 - pt) ** gamma * ce                    # (1, TN)

    # mask padded tail lanes of the last block
    col = jax.lax.broadcasted_iota(jnp.int32, (1, tn), 1) + i * tn
    focal = jnp.where(col < n_total, focal, 0.0)

    acc_ref[...] += jnp.sum(focal, axis=1, keepdims=True)

    @pl.when(i == pl.num_programs(0) - 1)
    def _finalize():
        out_ref[...] = acc_ref[...] * (1.0 / n_total)


def _pick_tile_rows(n, c, multiple, tile_rows=None):
    """Samples per grid step; `multiple` is the layout-required alignment."""
    if tile_rows is None:
        tile_rows = _TARGET_BLOCK_BYTES // (c * 4)
    tile_rows = max(multiple, (tile_rows // multiple) * multiple)
    if tile_rows >= n:
        return n  # single full block — always layout-legal
    return tile_rows


def focal_loss(logits, targets, *, alpha=1.0, gamma=2, tile_rows=None):
    """Mean focal loss. logits: (N, C) float, targets: (N,) integer class ids."""
    # TODO(synk): reduce=False (unreduced per-sample output) not implemented;
    # the module's default reduce=True (mean) semantics are kept.
    n, c = logits.shape
    targets = targets.astype(jnp.int32)

    compiler_params = pltpu.CompilerParams(
        dimension_semantics=("arbitrary",),            # row-tile axis is a reduction
        vmem_limit_bytes=48 * 1024 * 1024,
    )
    scratch = [pltpu.VMEM((1, 1), jnp.float32)]        # persistent sum accumulator
    out_shape = jax.ShapeDtypeStruct((1, 1), jnp.float32)
    out_spec = pl.BlockSpec((1, 1), lambda i: (0, 0))

    if c >= _LANE:
        # classes map to lanes: stream (TN, C) row blocks
        tn = _pick_tile_rows(n, c, _SUBLANE, tile_rows)
        kernel = functools.partial(_focal_sum_classes_on_lanes, n, alpha, gamma)
        out = pl.pallas_call(
            kernel,
            out_shape=out_shape,
            grid=(pl.cdiv(n, tn),),
            in_specs=[
                pl.BlockSpec((tn, c), lambda i: (i, 0)),
                pl.BlockSpec((tn, 1), lambda i: (i, 0)),
            ],
            out_specs=out_spec,
            scratch_shapes=scratch,
            compiler_params=compiler_params,
        )(logits, targets.reshape(n, 1))
    else:
        # narrow class dim: lane-dense layout with samples on lanes.  The
        # transpose is wrapper-side layout plumbing only.
        tn = _pick_tile_rows(n, c, _LANE, tile_rows)
        kernel = functools.partial(_focal_sum_samples_on_lanes, n, alpha, gamma)
        out = pl.pallas_call(
            kernel,
            out_shape=out_shape,
            grid=(pl.cdiv(n, tn),),
            in_specs=[
                pl.BlockSpec((c, tn), lambda i: (0, i)),
                pl.BlockSpec((1, tn), lambda i: (0, i)),
            ],
            out_specs=out_spec,
            scratch_shapes=scratch,
            compiler_params=compiler_params,
        )(logits.T, targets.reshape(1, n))
    return out[0, 0]


def _ref_focal(logits, targets, alpha=1.0, gamma=2):
    """Plain-JAX reference (same math as torch CrossEntropyLoss + focal)."""
    x = logits.astype(jnp.float32)
    lse = jax.nn.logsumexp(x, axis=-1)
    ce = lse - x[jnp.arange(x.shape[0]), targets]
    pt = jnp.exp(-ce)
    return jnp.mean(alpha * (1.0 - pt) ** gamma * ce)


if __name__ == "__main__":
    key = jax.random.PRNGKey(0)
    k1, k2, k3, k4 = jax.random.split(key, 4)

    # Case 1: small demo shape (C < 128 -> lane-dense samples-on-lanes path).
    N1, C1 = 8, 32
    logits1 = jax.random.normal(k1, (N1, C1), dtype=jnp.float32)
    targets1 = jax.random.randint(k2, (N1,), 0, C1, dtype=jnp.int32)
    loss1 = focal_loss(logits1, targets1)
    jax.block_until_ready(loss1)
    ref1 = _ref_focal(logits1, targets1)
    assert jnp.allclose(loss1, ref1, rtol=1e-4, atol=1e-6), (loss1, ref1)

    # Case 2: C >= 128 path, batch tiled (grid=3) with a masked padded tail.
    N2, C2 = 300, 256
    logits2 = jax.random.normal(k3, (N2, C2), dtype=jnp.float32)
    targets2 = jax.random.randint(k4, (N2,), 0, C2, dtype=jnp.int32)
    loss2 = focal_loss(logits2, targets2, tile_rows=128)
    jax.block_until_ready(loss2)
    ref2 = _ref_focal(logits2, targets2)
    assert jnp.allclose(loss2, ref2, rtol=1e-4, atol=1e-6), (loss2, ref2)

    # Case 3: C < 128 path, lane-tiled (grid=3) with a masked padded tail.
    N3, C3 = 300, 32
    logits3 = jax.random.normal(k1, (N3, C3), dtype=jnp.float32)
    targets3 = jax.random.randint(k2, (N3,), 0, C3, dtype=jnp.int32)
    loss3 = focal_loss(logits3, targets3, tile_rows=128)
    jax.block_until_ready(loss3)
    ref3 = _ref_focal(logits3, targets3)
    assert jnp.allclose(loss3, ref3, rtol=1e-4, atol=1e-6), (loss3, ref3)

    print("KERNEL_OK")
</pallas_src>

<mosaic_0001>
module attributes {stable_mosaic.version = 11 : i64} {
  func.func @_focal_sum_samples_on_lanes(%arg0: i32, %arg1: memref<32x8xf32, #tpu.memory_space<vmem>>, %arg2: memref<1x8xi32, #tpu.memory_space<vmem>>, %arg3: memref<1x1xf32, #tpu.memory_space<vmem>>, %arg4: memref<1x1xf32, #tpu.memory_space<vmem>>) attributes {dimension_semantics = [#tpu.dimension_semantics<arbitrary>], iteration_bounds = array<i64: 1>, scalar_prefetch = 0 : i64, scratch_operands = 1 : i64, tpu.core_type = #tpu.core_type<tc>, window_params = [{transform_indices = @transform_0, window_bounds = array<i64: 32, 8>}, {transform_indices = @transform_1, window_bounds = array<i64: 1, 8>}, {pipeline_mode = #tpu.pipeline_mode<synchronous>, transform_indices = @transform_2, window_bounds = array<i64: 1, 1>}]} {
    %c0_i32 = arith.constant 0 : i32
    %0 = arith.cmpi eq, %arg0, %c0_i32 : i32
    %1 = arith.extui %0 : i1 to i32
    %c0_i32_0 = arith.constant 0 : i32
    %2 = arith.cmpi ne, %1, %c0_i32_0 : i32
    scf.if %2 {
      %cst_18 = arith.constant 0.000000e+00 : f32
      %50 = vector.broadcast %cst_18 : f32 to vector<1x1xf32>
      %c0_19 = arith.constant 0 : index
      %c0_20 = arith.constant 0 : index
      %51 = vector.load %arg4[%c0_19, %c0_20] : memref<1x1xf32, #tpu.memory_space<vmem>>, vector<1x1xf32>
      tpu.vector_store %arg4[%c0_19, %c0_20], %50 {strides = array<i32>} : memref<1x1xf32, #tpu.memory_space<vmem>>, vector<1x1xf32>,
    } else {
    }
    %c0 = arith.constant 0 : index
    %c0_1 = arith.constant 0 : index
    %3 = vector.load %arg1[%c0, %c0_1] : memref<32x8xf32, #tpu.memory_space<vmem>>, vector<32x8xf32>
    %c0_2 = arith.constant 0 : index
    %c0_3 = arith.constant 0 : index
    %4 = vector.load %arg2[%c0_2, %c0_3] : memref<1x8xi32, #tpu.memory_space<vmem>>, vector<1x8xi32>
    %cst = arith.constant dense<0xFF800000> : vector<8xf32>
    %5 = vector.multi_reduction <maximumf>, %3, %cst [0] : vector<32x8xf32> to vector<8xf32>
    %6 = vector.shape_cast %5 : vector<8xf32> to vector<1x8xf32>
    %7 = vector.broadcast %6 : vector<1x8xf32> to vector<32x8xf32>
    %8 = arith.subf %3, %7 : vector<32x8xf32>
    %9 = math.exp %8 : vector<32x8xf32>
    %cst_4 = arith.constant dense<0.000000e+00> : vector<8xf32>
    %10 = vector.multi_reduction <add>, %9, %cst_4 [0] : vector<32x8xf32> to vector<8xf32>
    %11 = vector.shape_cast %10 : vector<8xf32> to vector<1x8xf32>
    %12 = tpu.iota {dimensions = array<i32: 0>} : vector<32x8xi32>
    %13 = vector.broadcast %4 : vector<1x8xi32> to vector<32x8xi32>
    %14 = arith.cmpi eq, %12, %13 : vector<32x8xi32>
    %15 = arith.extui %14 : vector<32x8xi1> to vector<32x8xi32>
    %16 = arith.sitofp %15 : vector<32x8xi32> to vector<32x8xf32>
    %17 = arith.mulf %16, %3 : vector<32x8xf32>
    %cst_5 = arith.constant dense<0.000000e+00> : vector<8xf32>
    %18 = vector.multi_reduction <add>, %17, %cst_5 [0] : vector<32x8xf32> to vector<8xf32>
    %19 = vector.shape_cast %18 : vector<8xf32> to vector<1x8xf32>
    %20 = arith.mulf %16, %9 : vector<32x8xf32>
    %cst_6 = arith.constant dense<0.000000e+00> : vector<8xf32>
    %21 = vector.multi_reduction <add>, %20, %cst_6 [0] : vector<32x8xf32> to vector<8xf32>
    %22 = vector.shape_cast %21 : vector<8xf32> to vector<1x8xf32>
    %23 = arith.subf %6, %19 : vector<1x8xf32>
    %24 = math.log %11 : vector<1x8xf32>
    %25 = arith.addf %23, %24 : vector<1x8xf32>
    %26 = tpu.reciprocal %11 : vector<1x8xf32> -> vector<1x8xf32>
    %27 = arith.mulf %22, %26 : vector<1x8xf32>
    %cst_7 = arith.constant 1.000000e+00 : f32
    %28 = vector.broadcast %cst_7 : f32 to vector<1x8xf32>
    %29 = arith.subf %28, %27 : vector<1x8xf32>
    %30 = arith.mulf %29, %29 : vector<1x8xf32>
    %cst_8 = arith.constant 1.000000e+00 : f32
    %31 = vector.broadcast %cst_8 : f32 to vector<1x8xf32>
    %32 = arith.mulf %31, %30 : vector<1x8xf32>
    %33 = arith.mulf %32, %25 : vector<1x8xf32>
    %34 = tpu.iota {dimensions = array<i32: 1>} : vector<1x8xi32>
    %c8_i32 = arith.constant 8 : i32
    %35 = arith.muli %arg0, %c8_i32 : i32
    %36 = vector.broadcast %35 : i32 to vector<1x8xi32>
    %37 = arith.addi %34, %36 : vector<1x8xi32>
    %c8_i32_9 = arith.constant 8 : i32
    %38 = vector.broadcast %c8_i32_9 : i32 to vector<1x8xi32>
    %39 = arith.cmpi slt, %37, %38 : vector<1x8xi32>
    %cst_10 = arith.constant 0.000000e+00 : f32
    %40 = vector.broadcast %cst_10 : f32 to vector<1x8xf32>
    %41 = arith.select %39, %33, %40 : vector<1x8xi1>, vector<1x8xf32>
    %c0_11 = arith.constant 0 : index
    %c0_12 = arith.constant 0 : index
    %42 = vector.load %arg4[%c0_11, %c0_12] : memref<1x1xf32, #tpu.memory_space<vmem>>, vector<1x1xf32>
    %cst_13 = arith.constant dense<0.000000e+00> : vector<1xf32>
    %43 = vector.multi_reduction <add>, %41, %cst_13 [1] : vector<1x8xf32> to vector<1xf32>
    %44 = vector.shape_cast %43 : vector<1xf32> to vector<1x1xf32>
    %45 = arith.addf %42, %44 : vector<1x1xf32>
    %c0_14 = arith.constant 0 : index
    %c0_15 = arith.constant 0 : index
    %46 = vector.load %arg4[%c0_14, %c0_15] : memref<1x1xf32, #tpu.memory_space<vmem>>, vector<1x1xf32>
    tpu.vector_store %arg4[%c0_14, %c0_15], %45 {strides = array<i32>} : memref<1x1xf32, #tpu.memory_space<vmem>>, vector<1x1xf32>,
    %c0_i32_16 = arith.constant 0 : i32
    %47 = arith.cmpi eq, %arg0, %c0_i32_16 : i32
    %48 = arith.extui %47 : i1 to i32
    %c0_i32_17 = arith.constant 0 : i32
    %49 = arith.cmpi ne, %48, %c0_i32_17 : i32
    scf.if %49 {
      %c0_18 = arith.constant 0 : index
      %c0_19 = arith.constant 0 : index
      %50 = vector.load %arg4[%c0_18, %c0_19] : memref<1x1xf32, #tpu.memory_space<vmem>>, vector<1x1xf32>
      %cst_20 = arith.constant 1.250000e-01 : f32
      %51 = vector.broadcast %cst_20 : f32 to vector<1x1xf32>
      %52 = arith.mulf %50, %51 : vector<1x1xf32>
      %c0_21 = arith.constant 0 : index
      %c0_22 = arith.constant 0 : index
      %53 = vector.load %arg3[%c0_21, %c0_22] : memref<1x1xf32, #tpu.memory_space<vmem>>, vector<1x1xf32>
      tpu.vector_store %arg3[%c0_21, %c0_22], %52 {strides = array<i32>} : memref<1x1xf32, #tpu.memory_space<vmem>>, vector<1x1xf32>,
    } else {
    }
    return
  }
  func.func @transform_0(%arg0: i32) -> (i32, i32) {
    %c0_i32 = arith.constant 0 : i32
    %c0_i32_0 = arith.constant 0 : i32
    return %c0_i32, %arg0 : i32, i32
  }
  func.func @transform_1(%arg0: i32) -> (i32, i32) {
    %c0_i32 = arith.constant 0 : i32
    %c0_i32_0 = arith.constant 0 : i32
    return %c0_i32, %arg0 : i32, i32
  }
  func.func @transform_2(%arg0: i32) -> (i32, i32) {
    %c0_i32 = arith.constant 0 : i32
    %c0_i32_0 = arith.constant 0 : i32
    %c0_i32_1 = arith.constant 0 : i32
    return %c0_i32, %c0_i32_0 : i32, i32
  }
}

</mosaic_0001>

<llo_original>
// kernel: tpu_custom_call.1
$region0: #{tpu_custom_call.1}
  #allocation0 [shape = 'u32[]', space=smem, size = 0x4, offset = 0x4, fixed_abs, tag = 'smem constant byte address 0x4 - core index']
  #allocation1 [shape = 'u32[144,128]{1,0:T(1,128)}', space=vmem, size = 0x12000, scoped, tag = 'internal scratch']
  #allocation2 [shape = 'f32[1,1]{1,0:T(1,128)}', space=vmem, size = 0x200, scoped, tag = 'scratch operand']
  %s0 = inlined_call_operand.vmem [shape: f32[32,8], index: 0, kind: input, shape index: {}]
  %s1 = inlined_call_operand.vmem [shape: s32[1,8], index: 1, kind: input, shape index: {}]
  %s2 = inlined_call_operand.hbm [shape: f32[1,1], index: 2, kind: output, shape index: {}]
  %s3 = sld [smem:[#allocation0]]
  $region26: #{tpu_custom_call.1} parent=0
    _
  %s5 = ssub.s32 1, %s3
  %s6 = scalar_select 0, %s5, %s3
  $region1: #{tpu_custom_call.1} parent=0
    #allocation3 [shape = 'u8[512]{0}', space=vmem, size = 0x400, scoped, tag = 'output window, operand 0, single buffered']
    #allocation4 [shape = 's32[1]{0}', space=sflag, size = 0x4, scoped, tag = 'scoped memory for tpu_custom_call.1']
    %7 = vsyncpa [#allocation4], 0
    // Predicated region
    $region2: #{tpu_custom_call.1} parent=1 // pred_check
      _
    $region3: #{tpu_custom_call.1} parent=1 // pred_check_branch
      %9 = sbr.rel (0) target = $region5
    $region4: #{tpu_custom_call.1} parent=1 // pred_region
      _
    $region5: #{tpu_custom_call.1} parent=1 // pred_fallthru
      _
    // Predicated region
    $region6: #{tpu_custom_call.1} parent=1 // pred_check
      _
    $region7: #{tpu_custom_call.1} parent=1 // pred_check_branch
      %11 = sbr.rel (0) target = $region9
    $region8: #{tpu_custom_call.1} parent=1 // pred_region
      _
    $region9: #{tpu_custom_call.1} parent=1 // pred_fallthru
      _
    %p12 = scmp.eq.s32.totalorder 0, 0
    // Predicated region
    $region10: #{tpu_custom_call.1} parent=1 // pred_check
      %p13 = pneg %p12
    $region11: #{tpu_custom_call.1} parent=1 // pred_check_branch
      %15 = sbr.rel (%p13) target = $region13
    $region12: #{tpu_custom_call.1} parent=1 // pred_region
      %vm16 = vcmask 0
      %17 = vst.msk [vmem:[#allocation2] sm:$0x1] %vm16, 0.0
    $region13: #{tpu_custom_call.1} parent=1 // pred_fallthru
      _
    %v18 = vld [vmem:[%s0] sm:$0xff]
    %v19 = vld [vmem:[%s0 + $0x8] sm:$0xff]
    %v20 = vld [vmem:[%s0 + $0x10] sm:$0xff]
    %v21 = vld [vmem:[%s0 + $0x18] sm:$0xff]
    %v22 = vld [vmem:[%s1] sm:$0x1]
    %vm23 = vcmask 64512
    %v24 = vsel %vm23, %v18, -inf
    %v25 = vsel %vm23, %v19, -inf
    %v26 = vsel %vm23, %v20, -inf
    %v27 = vsel %vm23, %v21, -inf
    %v28 = vmax.f32 %v24, %v25
    %v29 = vmax.f32 %v26, %v27
    %v30 = vmax.f32 %v28, %v29
    %v31 = vrot.slane %v30, 4
    %v32 = vmax.f32 %v30, %v31
    %v33 = vrot.slane %v32, 2
    %v34 = vmax.f32 %v32, %v33
    %v35 = vrot.slane %v34, 1
    %v36 = vmax.f32 %v34, %v35
    %v37 = vsub.f32 %v18, %v36
    %v38 = vsub.f32 %v19, %v36
    %v39 = vsub.f32 %v20, %v36
    %v40 = vsub.f32 %v21, %v36
    %v41 = vmul.f32 %v37, 1.442695
    %v42 = vpow.pop %v41
    %v43 = vmul.f32 %v38, 1.442695
    %v44 = vpow.pop %v43
    %v45 = vmul.f32 %v39, 1.442695
    %v46 = vpow.pop %v45
    %v47 = vmul.f32 %v40, 1.442695
    %v48 = vpow.pop %v47
    %v49 = vsel %vm23, %v42, 0.0
    %v50 = vsel %vm23, %v44, 0.0
    %v51 = vadd.f32 %v49, %v50
    %v52 = vsel %vm23, %v46, 0.0
    %v53 = vadd.f32 %v51, %v52
    %v54 = vsel %vm23, %v48, 0.0
    %v55 = vadd.f32 %v53, %v54
    %v56 = vrot.slane %v55, 4
    %v57 = vadd.f32 %v55, %v56
    %v58 = vrot.slane %v57, 2
    %v59 = vadd.f32 %v57, %v58
    %v60 = vrot.slane %v59, 1
    %v61 = vadd.f32 %v59, %v60
    %v62 = vlaneseq
    %v63 = vshrl.u32 %v62, 7
    %v64 = vadd.s32 %v63, 8
    %v65 = vadd.s32 %v63, 16
    %v66 = vadd.s32 %v63, 24
    %v67 = vlaneseq
    %v68 = vshrl.u32 %v67, 7
    %v69 = vsub.s32 0, %v68
    %v70 = vrot.slane %v22, %v69
    %vm71 = vcmp.eq.s32.totalorder %v63, %v70
    %vm72 = vcmp.eq.s32.totalorder %v64, %v70
    %vm73 = vcmp.eq.s32.totalorder %v65, %v70
    %vm74 = vcmp.eq.s32.totalorder %v66, %v70
    %v75 = vsel %vm71, 1, 0
    %v76 = vsel %vm72, 1, 0
    %v77 = vsel %vm73, 1, 0
    %v78 = vsel %vm74, 1, 0
    %v79 = vcvt.s32.f32 %v75
    %v80 = vcvt.s32.f32 %v76
    %v81 = vcvt.s32.f32 %v77
    %v82 = vcvt.s32.f32 %v78
    %v83 = vmul.f32 %v79, %v18
    %v84 = vmul.f32 %v80, %v19
    %v85 = vmul.f32 %v81, %v20
    %v86 = vmul.f32 %v82, %v21
    %v87 = vsel %vm23, %v83, 0.0
    %v88 = vsel %vm23, %v84, 0.0
    %v89 = vadd.f32 %v87, %v88
    %v90 = vsel %vm23, %v85, 0.0
    %v91 = vadd.f32 %v89, %v90
    %v92 = vsel %vm23, %v86, 0.0
    %v93 = vadd.f32 %v91, %v92
    %v94 = vrot.slane %v93, 4
    %v95 = vadd.f32 %v93, %v94
    %v96 = vrot.slane %v95, 2
    %v97 = vadd.f32 %v95, %v96
    %v98 = vrot.slane %v97, 1
    %v99 = vadd.f32 %v97, %v98
    %v100 = vmul.f32 %v79, %v42
    %v101 = vmul.f32 %v80, %v44
    %v102 = vmul.f32 %v81, %v46
    %v103 = vmul.f32 %v82, %v48
    %v104 = vsel %vm23, %v100, 0.0
    %v105 = vsel %vm23, %v101, 0.0
    %v106 = vadd.f32 %v104, %v105
    %v107 = vsel %vm23, %v102, 0.0
    %v108 = vadd.f32 %v106, %v107
    %v109 = vsel %vm23, %v103, 0.0
    %v110 = vadd.f32 %v108, %v109
    %v111 = vrot.slane %v110, 4
    %v112 = vadd.f32 %v110, %v111
    %v113 = vrot.slane %v112, 2
    %v114 = vadd.f32 %v112, %v113
    %v115 = vrot.slane %v114, 1
    %v116 = vadd.f32 %v114, %v115
    %v117 = vsub.f32 %v36, %v99
    %v118 = vlog2.pop %v61
    %v119 = vmul.f32 %v118, 0.6931472
    %v120 = vadd.f32 %v117, %v119
    %v121 = vrcp.pop %v61
    %v122 = vmul.f32 %v116, %v121
    %v123 = vsub.f32 1.0, %v122
    %v124 = vmul.f32 %v123, %v123
    %v125 = vmul.f32 %v124, %v120
    %v126 = vlaneseq
    %v127 = vand.u32 %v126, 127
    %s128 = smul.u32 0, 8
    %v129 = vstv %s128
    %v130 = vadd.s32 %v127, %v129
    %vm131 = vcmp.lt.s32.totalorder %v130, 8
    %v132 = vsel %vm131, %v125, 0.0
    %v133 = vld [vmem:[#allocation2] sm:$0x1]
    %v134 = vsel %vm23, %v132, 0.0
    %135 = vadd.xlane.f32.xlu0 %v134
    %v136 = vpop.xlane.xlu0 %135
    %v137 = vadd.f32 %v133, %v136
    %vm138 = vcmask 0
    %139 = vst.msk [vmem:[#allocation2] sm:$0x1] %vm138, %v137
    // Predicated region
    $region14: #{tpu_custom_call.1} parent=1 // pred_check
      %p140 = pneg %p12
    $region15: #{tpu_custom_call.1} parent=1 // pred_check_branch
      %142 = sbr.rel (%p140) target = $region17
    $region16: #{tpu_custom_call.1} parent=1 // pred_region
      %v143 = vld [vmem:[#allocation2] sm:$0x1]
      %v144 = vmul.f32 %v143, 0.125
      %145 = vst.msk [vmem:[#allocation3] sm:$0x1] %vm138, %v144
    $region17: #{tpu_custom_call.1} parent=1 // pred_fallthru
      _
    // Predicated region
    $region18: #{tpu_custom_call.1} parent=1 // pred_check
      _
    $region19: #{tpu_custom_call.1} parent=1 // pred_check_branch
      %147 = sbr.rel (0) target = $region21
    $region20: #{tpu_custom_call.1} parent=1 // pred_region
      %s149 = ssub.s32 16, 16
      %150 = vsyncadd [#allocation4], %s149
      %s152 = sshll.u32 [#allocation3], 4
      %s153 = int_to_ptr.vmem [resolvable:$true] %s152
      %155 = dma.vmem_to_hbm [thread:$0]  %s153, 16, %s2, [#allocation4]
    $region21: #{tpu_custom_call.1} parent=1 // pred_fallthru
      _
    // Predicated region
    $region22: #{tpu_custom_call.1} parent=1 // pred_check
      _
    $region23: #{tpu_custom_call.1} parent=1 // pred_check_branch
      %157 = sbr.rel (0) target = $region25
    $region24: #{tpu_custom_call.1} parent=1 // pred_region
      %158 = dma.done [#allocation4], 16
    $region25: #{tpu_custom_call.1} parent=1 // pred_fallthru
      _
    %159 = vsyncpa [#allocation4], 1

</llo_original>
